<compile_context>
chip_gen: v7x
topology: tpu7x:2x2x1
jax: 0.10.0
libtpu: 0.0.40
codegen_flags: <defaults>
</compile_context>

<pallas_src>
import functools

import jax
import jax.numpy as jnp
from jax.experimental import pallas as pl
from jax.experimental.pallas import tpu as pltpu


# ---------------------------------------------------------------------------
# dims == 2  :  (B, H, W) -> (B * o0 * o1, k0, k1)   with o0 = H//k0, o1 = W//k1
# ---------------------------------------------------------------------------
def _wide2batch_3d_fast_kernel(x_ref, o_ref, *, rpb, k0, k1, o1):
    """x_ref: (1, rpb*k0, W) input band; o_ref: (1, rpb, k0*W) lane-dense rows.

    Row i of the output block is the flattened (o1, k0, k1) patch tensor of
    patch-row i, i.e. exactly the contiguous chunk PyTorch's
    permute+contiguous produces for that patch-row.
    """
    W = o1 * k1
    for i in range(rpb):                               # static unroll, rpb is small
        blk = x_ref[0, i * k0:(i + 1) * k0, :]         # (k0, W)
        t = blk.T                                      # (W, k0)       [j*k1+c, r]
        t = t.reshape(o1, k1, k0)                      #               [j, c, r]
        t = jnp.swapaxes(t, -1, -2)                    # (o1, k0, k1)  [j, r, c]
        # Single lane-dense (full row) store per patch-row.
        o_ref[0, i:i + 1, :] = t.reshape(1, k0 * W)


def _pick_rows_per_band(o0, k0, W, itemsize, max_band_bytes=1 << 20):
    """Largest divisor of o0 whose (rpb*k0, W) input band fits the byte budget."""
    rpb = 1
    for d in range(1, o0 + 1):
        if o0 % d == 0 and d * k0 * W * itemsize <= max_band_bytes:
            rpb = d
    return rpb


def _wide2batch_3d_fast(x, k0, k1):
    B, H, W = x.shape
    o0, o1 = H // k0, W // k1
    itemsize = jnp.dtype(x.dtype).itemsize
    rpb = _pick_rows_per_band(o0, k0, W, itemsize)
    n_bands = o0 // rpb

    kernel = functools.partial(
        _wide2batch_3d_fast_kernel, rpb=rpb, k0=k0, k1=k1, o1=o1)

    flat = pl.pallas_call(
        kernel,
        out_shape=jax.ShapeDtypeStruct((B, o0, k0 * W), x.dtype),
        grid_spec=pltpu.PrefetchScalarGridSpec(
            num_scalar_prefetch=0,
            grid=(B, n_bands),
            in_specs=[pl.BlockSpec((1, rpb * k0, W), lambda b, n: (b, n, 0))],
            out_specs=pl.BlockSpec((1, rpb, k0 * W), lambda b, n: (b, n, 0)),
        ),
        compiler_params=pltpu.CompilerParams(
            dimension_semantics=("parallel", "parallel")),
        cost_estimate=pl.CostEstimate(
            flops=0,
            transcendentals=0,
            bytes_accessed=2 * B * H * W * itemsize),
    )(x)
    # Flat memory order of `flat` already matches the PyTorch result, so this
    # reshape is metadata-only.
    return flat.reshape(B * o0 * o1, k0, k1)


# --- Fallback: per-patch copy kernel (known-good op set: ref slices only). ---
def _wide2batch_3d_safe_kernel(x_ref, o_ref, *, k0, k1, o0, o1):
    for i in range(o0):
        for j in range(o1):
            o_ref[i * o1 + j, :, :] = x_ref[0, i * k0:(i + 1) * k0,
                                            j * k1:(j + 1) * k1]


def _wide2batch_3d_safe(x, k0, k1):
    B, H, W = x.shape
    o0, o1 = H // k0, W // k1
    kernel = functools.partial(_wide2batch_3d_safe_kernel,
                               k0=k0, k1=k1, o0=o0, o1=o1)
    return pl.pallas_call(
        kernel,
        out_shape=jax.ShapeDtypeStruct((B * o0 * o1, k0, k1), x.dtype),
        grid_spec=pltpu.PrefetchScalarGridSpec(
            num_scalar_prefetch=0,
            grid=(B,),
            in_specs=[pl.BlockSpec((1, H, W), lambda b: (b, 0, 0))],
            out_specs=pl.BlockSpec((o0 * o1, k0, k1), lambda b: (b, 0, 0)),
        ),
        compiler_params=pltpu.CompilerParams(
            dimension_semantics=("parallel",)),
    )(x)


def wide2batch_3d(x, kernel_size):
    B, H, W = x.shape
    k0, k1 = int(kernel_size[0]), int(kernel_size[1])
    if H % k0 != 0 or W % k1 != 0:
        raise ValueError(
            f"Spatial dims ({H}, {W}) must be divisible by kernel size ({k0}, {k1}).")
    try:
        out = _wide2batch_3d_fast(x, k0, k1)
        return jax.block_until_ready(out)
    except Exception:
        # TODO(synk): drop this fallback once the in-kernel reshape/transpose
        # relayouts are guaranteed to lower on every Mosaic/jaxlib version.
        return _wide2batch_3d_safe(x, k0, k1)


# ---------------------------------------------------------------------------
# dims == 1  :  x.view(-1, kernalSize)
# ---------------------------------------------------------------------------
def wide2batch_2d(x, kernel_size):
    k = int(kernel_size)
    if x.size % k != 0:
        raise ValueError(
            f"Input with {x.size} elements cannot be viewed as (-1, {k}).")
    # PyTorch's .view(-1, k) is metadata-only.  Emitting a Pallas copy kernel
    # here would force a full HBM->VMEM->HBM round trip for zero work (perf
    # review), so this path is a pure metadata reshape.
    return jnp.reshape(x, (x.size // k, k))


# ---------------------------------------------------------------------------
# Module-like wrapper (no parameters to initialize: Wide2bacth has none)
# ---------------------------------------------------------------------------
class Wide2batchPallas:
    def __init__(self, dims):
        if dims == 1:
            self._fn = wide2batch_2d
        elif dims == 2:
            self._fn = wide2batch_3d
        else:
            raise NotImplementedError("Filter size not implemented")

    def __call__(self, x, kernel_size):
        return self._fn(x, kernel_size)


# ---------------------------------------------------------------------------
# Pure-JAX references (mirror the PyTorch code exactly)
# ---------------------------------------------------------------------------
def _ref_forward3d(x, kernel_size):
    B, H, W = x.shape
    k0, k1 = kernel_size
    o0, o1 = H // k0, W // k1
    y = x.reshape(B, o0, k0, o1, k1)
    y = jnp.transpose(y, (0, 1, 3, 2, 4))
    return y.reshape(-1, k0, k1)


def _ref_forward2d(x, kernel_size):
    return x.reshape(-1, kernel_size)


if __name__ == "__main__":
    key = jax.random.PRNGKey(0)
    k1_, k2_ = jax.random.split(key)

    # dims == 2 path:  x (B=2, H=16, W=16), kernel (4, 4) -> (32, 4, 4)
    x3d = jax.random.normal(k1_, (2, 16, 16), dtype=jnp.float32)
    mod3d = Wide2batchPallas(dims=2)
    out3d = jax.block_until_ready(mod3d(x3d, (4, 4)))
    ref3d = _ref_forward3d(x3d, (4, 4))
    assert out3d.shape == ref3d.shape == (32, 4, 4)
    assert jnp.array_equal(out3d, ref3d)

    # dims == 1 path:  x (4, 32), kernalSize = 8 -> (16, 8)
    x2d = jax.random.normal(k2_, (4, 32), dtype=jnp.float32)
    mod2d = Wide2batchPallas(dims=1)
    out2d = jax.block_until_ready(mod2d(x2d, 8))
    ref2d = _ref_forward2d(x2d, 8)
    assert out2d.shape == ref2d.shape == (16, 8)
    assert jnp.array_equal(out2d, ref2d)

    print("KERNEL_OK")
</pallas_src>

<mosaic_0001>
module attributes {stable_mosaic.version = 11 : i64} {
  func.func @_wide2batch_3d_fast_kernel(%arg0: i32, %arg1: i32, %arg2: memref<1x16x16xf32, #tpu.memory_space<vmem>>, %arg3: memref<1x4x64xf32, #tpu.memory_space<vmem>>) attributes {dimension_semantics = [#tpu.dimension_semantics<parallel>, #tpu.dimension_semantics<parallel>], iteration_bounds = array<i64: 2, 1>, scalar_prefetch = 0 : i64, scratch_operands = 0 : i64, tpu.core_type = #tpu.core_type<tc>, window_params = [{transform_indices = @transform_0, window_bounds = array<i64: 1, 16, 16>}, {transform_indices = @transform_1, window_bounds = array<i64: 1, 4, 64>}]} {
    %c0 = arith.constant 0 : index
    %c0_0 = arith.constant 0 : index
    %c0_1 = arith.constant 0 : index
    %0 = vector.load %arg2[%c0, %c0_0, %c0_1] : memref<1x16x16xf32, #tpu.memory_space<vmem>>, vector<1x4x16xf32>
    %1 = vector.shape_cast %0 : vector<1x4x16xf32> to vector<4x16xf32>
    %2 = tpu.transpose %1, [1, 0] : vector<4x16xf32> -> vector<16x4xf32>
    %3 = vector.shape_cast %2 : vector<16x4xf32> to vector<4x4x4xf32>
    %4 = tpu.transpose %3, [0, 2, 1] : vector<4x4x4xf32> -> vector<4x4x4xf32>
    %5 = vector.shape_cast %4 : vector<4x4x4xf32> to vector<1x64xf32>
    %c0_2 = arith.constant 0 : index
    %c0_3 = arith.constant 0 : index
    %c0_4 = arith.constant 0 : index
    %6 = vector.load %arg3[%c0_2, %c0_3, %c0_4] : memref<1x4x64xf32, #tpu.memory_space<vmem>>, vector<1x1x64xf32>
    %7 = vector.shape_cast %6 : vector<1x1x64xf32> to vector<1x64xf32>
    %8 = vector.shape_cast %5 : vector<1x64xf32> to vector<1x1x64xf32>
    tpu.vector_store %arg3[%c0_2, %c0_3, %c0_4], %8 {strides = array<i32>} : memref<1x4x64xf32, #tpu.memory_space<vmem>>, vector<1x1x64xf32>,
    %c0_5 = arith.constant 0 : index
    %c4 = arith.constant 4 : index
    %c0_6 = arith.constant 0 : index
    %9 = vector.load %arg2[%c0_5, %c4, %c0_6] : memref<1x16x16xf32, #tpu.memory_space<vmem>>, vector<1x4x16xf32>
    %10 = vector.shape_cast %9 : vector<1x4x16xf32> to vector<4x16xf32>
    %11 = tpu.transpose %10, [1, 0] : vector<4x16xf32> -> vector<16x4xf32>
    %12 = vector.shape_cast %11 : vector<16x4xf32> to vector<4x4x4xf32>
    %13 = tpu.transpose %12, [0, 2, 1] : vector<4x4x4xf32> -> vector<4x4x4xf32>
    %14 = vector.shape_cast %13 : vector<4x4x4xf32> to vector<1x64xf32>
    %c0_7 = arith.constant 0 : index
    %c1 = arith.constant 1 : index
    %c0_8 = arith.constant 0 : index
    %15 = vector.load %arg3[%c0_7, %c1, %c0_8] : memref<1x4x64xf32, #tpu.memory_space<vmem>>, vector<1x1x64xf32>
    %16 = vector.shape_cast %15 : vector<1x1x64xf32> to vector<1x64xf32>
    %17 = vector.shape_cast %14 : vector<1x64xf32> to vector<1x1x64xf32>
    tpu.vector_store %arg3[%c0_7, %c1, %c0_8], %17 {strides = array<i32>} : memref<1x4x64xf32, #tpu.memory_space<vmem>>, vector<1x1x64xf32>,
    %c0_9 = arith.constant 0 : index
    %c8 = arith.constant 8 : index
    %c0_10 = arith.constant 0 : index
    %18 = vector.load %arg2[%c0_9, %c8, %c0_10] : memref<1x16x16xf32, #tpu.memory_space<vmem>>, vector<1x4x16xf32>
    %19 = vector.shape_cast %18 : vector<1x4x16xf32> to vector<4x16xf32>
    %20 = tpu.transpose %19, [1, 0] : vector<4x16xf32> -> vector<16x4xf32>
    %21 = vector.shape_cast %20 : vector<16x4xf32> to vector<4x4x4xf32>
    %22 = tpu.transpose %21, [0, 2, 1] : vector<4x4x4xf32> -> vector<4x4x4xf32>
    %23 = vector.shape_cast %22 : vector<4x4x4xf32> to vector<1x64xf32>
    %c0_11 = arith.constant 0 : index
    %c2 = arith.constant 2 : index
    %c0_12 = arith.constant 0 : index
    %24 = vector.load %arg3[%c0_11, %c2, %c0_12] : memref<1x4x64xf32, #tpu.memory_space<vmem>>, vector<1x1x64xf32>
    %25 = vector.shape_cast %24 : vector<1x1x64xf32> to vector<1x64xf32>
    %26 = vector.shape_cast %23 : vector<1x64xf32> to vector<1x1x64xf32>
    tpu.vector_store %arg3[%c0_11, %c2, %c0_12], %26 {strides = array<i32>} : memref<1x4x64xf32, #tpu.memory_space<vmem>>, vector<1x1x64xf32>,
    %c0_13 = arith.constant 0 : index
    %c12 = arith.constant 12 : index
    %c0_14 = arith.constant 0 : index
    %27 = vector.load %arg2[%c0_13, %c12, %c0_14] : memref<1x16x16xf32, #tpu.memory_space<vmem>>, vector<1x4x16xf32>
    %28 = vector.shape_cast %27 : vector<1x4x16xf32> to vector<4x16xf32>
    %29 = tpu.transpose %28, [1, 0] : vector<4x16xf32> -> vector<16x4xf32>
    %30 = vector.shape_cast %29 : vector<16x4xf32> to vector<4x4x4xf32>
    %31 = tpu.transpose %30, [0, 2, 1] : vector<4x4x4xf32> -> vector<4x4x4xf32>
    %32 = vector.shape_cast %31 : vector<4x4x4xf32> to vector<1x64xf32>
    %c0_15 = arith.constant 0 : index
    %c3 = arith.constant 3 : index
    %c0_16 = arith.constant 0 : index
    %33 = vector.load %arg3[%c0_15, %c3, %c0_16] : memref<1x4x64xf32, #tpu.memory_space<vmem>>, vector<1x1x64xf32>
    %34 = vector.shape_cast %33 : vector<1x1x64xf32> to vector<1x64xf32>
    %35 = vector.shape_cast %32 : vector<1x64xf32> to vector<1x1x64xf32>
    tpu.vector_store %arg3[%c0_15, %c3, %c0_16], %35 {strides = array<i32>} : memref<1x4x64xf32, #tpu.memory_space<vmem>>, vector<1x1x64xf32>,
    return
  }
  func.func @transform_0(%arg0: i32, %arg1: i32) -> (i32, i32, i32) {
    %c0_i32 = arith.constant 0 : i32
    %c0_i32_0 = arith.constant 0 : i32
    return %arg0, %arg1, %c0_i32 : i32, i32, i32
  }
  func.func @transform_1(%arg0: i32, %arg1: i32) -> (i32, i32, i32) {
    %c0_i32 = arith.constant 0 : i32
    %c0_i32_0 = arith.constant 0 : i32
    return %arg0, %arg1, %c0_i32 : i32, i32, i32
  }
}

module attributes {stable_mosaic.version = 11 : i64} {
  func.func @_wide2batch_3d_safe_kernel(%arg0: i32, %arg1: memref<1x16x16xf32, #tpu.memory_space<vmem>>, %arg2: memref<16x4x4xf32, #tpu.memory_space<vmem>>) attributes {dimension_semantics = [#tpu.dimension_semantics<parallel>], iteration_bounds = array<i64: 2>, scalar_prefetch = 0 : i64, scratch_operands = 0 : i64, tpu.core_type = #tpu.core_type<tc>, window_params = [{transform_indices = @transform_0, window_bounds = array<i64: 1, 16, 16>}, {transform_indices = @transform_1, window_bounds = array<i64: 16, 4, 4>}]} {
    %c0 = arith.constant 0 : index
    %c0_0 = arith.constant 0 : index
    %c0_1 = arith.constant 0 : index
    %0 = vector.load %arg1[%c0, %c0_0, %c0_1] : memref<1x16x16xf32, #tpu.memory_space<vmem>>, vector<1x4x4xf32>
    %1 = vector.shape_cast %0 : vector<1x4x4xf32> to vector<4x4xf32>
    %c0_2 = arith.constant 0 : index
    %c0_3 = arith.constant 0 : index
    %c0_4 = arith.constant 0 : index
    %2 = vector.load %arg2[%c0_2, %c0_3, %c0_4] : memref<16x4x4xf32, #tpu.memory_space<vmem>>, vector<1x4x4xf32>
    %3 = vector.shape_cast %2 : vector<1x4x4xf32> to vector<4x4xf32>
    %4 = vector.shape_cast %1 : vector<4x4xf32> to vector<1x4x4xf32>
    tpu.vector_store %arg2[%c0_2, %c0_3, %c0_4], %4 {strides = array<i32>} : memref<16x4x4xf32, #tpu.memory_space<vmem>>, vector<1x4x4xf32>,
    %c0_5 = arith.constant 0 : index
    %c0_6 = arith.constant 0 : index
    %c4 = arith.constant 4 : index
    %5 = vector.load %arg1[%c0_5, %c0_6, %c4] : memref<1x16x16xf32, #tpu.memory_space<vmem>>, vector<1x4x4xf32>
    %6 = vector.shape_cast %5 : vector<1x4x4xf32> to vector<4x4xf32>
    %c1 = arith.constant 1 : index
    %c0_7 = arith.constant 0 : index
    %c0_8 = arith.constant 0 : index
    %7 = vector.load %arg2[%c1, %c0_7, %c0_8] : memref<16x4x4xf32, #tpu.memory_space<vmem>>, vector<1x4x4xf32>
    %8 = vector.shape_cast %7 : vector<1x4x4xf32> to vector<4x4xf32>
    %9 = vector.shape_cast %6 : vector<4x4xf32> to vector<1x4x4xf32>
    tpu.vector_store %arg2[%c1, %c0_7, %c0_8], %9 {strides = array<i32>} : memref<16x4x4xf32, #tpu.memory_space<vmem>>, vector<1x4x4xf32>,
    %c0_9 = arith.constant 0 : index
    %c0_10 = arith.constant 0 : index
    %c8 = arith.constant 8 : index
    %10 = vector.load %arg1[%c0_9, %c0_10, %c8] : memref<1x16x16xf32, #tpu.memory_space<vmem>>, vector<1x4x4xf32>
    %11 = vector.shape_cast %10 : vector<1x4x4xf32> to vector<4x4xf32>
    %c2 = arith.constant 2 : index
    %c0_11 = arith.constant 0 : index
    %c0_12 = arith.constant 0 : index
    %12 = vector.load %arg2[%c2, %c0_11, %c0_12] : memref<16x4x4xf32, #tpu.memory_space<vmem>>, vector<1x4x4xf32>
    %13 = vector.shape_cast %12 : vector<1x4x4xf32> to vector<4x4xf32>
    %14 = vector.shape_cast %11 : vector<4x4xf32> to vector<1x4x4xf32>
    tpu.vector_store %arg2[%c2, %c0_11, %c0_12], %14 {strides = array<i32>} : memref<16x4x4xf32, #tpu.memory_space<vmem>>, vector<1x4x4xf32>,
    %c0_13 = arith.constant 0 : index
    %c0_14 = arith.constant 0 : index
    %c12 = arith.constant 12 : index
    %15 = vector.load %arg1[%c0_13, %c0_14, %c12] : memref<1x16x16xf32, #tpu.memory_space<vmem>>, vector<1x4x4xf32>
    %16 = vector.shape_cast %15 : vector<1x4x4xf32> to vector<4x4xf32>
    %c3 = arith.constant 3 : index
    %c0_15 = arith.constant 0 : index
    %c0_16 = arith.constant 0 : index
    %17 = vector.load %arg2[%c3, %c0_15, %c0_16] : memref<16x4x4xf32, #tpu.memory_space<vmem>>, vector<1x4x4xf32>
    %18 = vector.shape_cast %17 : vector<1x4x4xf32> to vector<4x4xf32>
    %19 = vector.shape_cast %16 : vector<4x4xf32> to vector<1x4x4xf32>
    tpu.vector_store %arg2[%c3, %c0_15, %c0_16], %19 {strides = array<i32>} : memref<16x4x4xf32, #tpu.memory_space<vmem>>, vector<1x4x4xf32>,
    %c0_17 = arith.constant 0 : index
    %c4_18 = arith.constant 4 : index
    %c0_19 = arith.constant 0 : index
    %20 = vector.load %arg1[%c0_17, %c4_18, %c0_19] : memref<1x16x16xf32, #tpu.memory_space<vmem>>, vector<1x4x4xf32>
    %21 = vector.shape_cast %20 : vector<1x4x4xf32> to vector<4x4xf32>
    %c4_20 = arith.constant 4 : index
    %c0_21 = arith.constant 0 : index
    %c0_22 = arith.constant 0 : index
    %22 = vector.load %arg2[%c4_20, %c0_21, %c0_22] : memref<16x4x4xf32, #tpu.memory_space<vmem>>, vector<1x4x4xf32>
    %23 = vector.shape_cast %22 : vector<1x4x4xf32> to vector<4x4xf32>
    %24 = vector.shape_cast %21 : vector<4x4xf32> to vector<1x4x4xf32>
    tpu.vector_store %arg2[%c4_20, %c0_21, %c0_22], %24 {strides = array<i32>} : memref<16x4x4xf32, #tpu.memory_space<vmem>>, vector<1x4x4xf32>,
    %c0_23 = arith.constant 0 : index
    %c4_24 = arith.constant 4 : index
    %c4_25 = arith.constant 4 : index
    %25 = vector.load %arg1[%c0_23, %c4_24, %c4_25] : memref<1x16x16xf32, #tpu.memory_space<vmem>>, vector<1x4x4xf32>
    %26 = vector.shape_cast %25 : vector<1x4x4xf32> to vector<4x4xf32>
    %c5 = arith.constant 5 : index
    %c0_26 = arith.constant 0 : index
    %c0_27 = arith.constant 0 : index
    %27 = vector.load %arg2[%c5, %c0_26, %c0_27] : memref<16x4x4xf32, #tpu.memory_space<vmem>>, vector<1x4x4xf32>
    %28 = vector.shape_cast %27 : vector<1x4x4xf32> to vector<4x4xf32>
    %29 = vector.shape_cast %26 : vector<4x4xf32> to vector<1x4x4xf32>
    tpu.vector_store %arg2[%c5, %c0_26, %c0_27], %29 {strides = array<i32>} : memref<16x4x4xf32, #tpu.memory_space<vmem>>, vector<1x4x4xf32>,
    %c0_28 = arith.constant 0 : index
    %c4_29 = arith.constant 4 : index
    %c8_30 = arith.constant 8 : index
    %30 = vector.load %arg1[%c0_28, %c4_29, %c8_30] : memref<1x16x16xf32, #tpu.memory_space<vmem>>, vector<1x4x4xf32>
    %31 = vector.shape_cast %30 : vector<1x4x4xf32> to vector<4x4xf32>
    %c6 = arith.constant 6 : index
    %c0_31 = arith.constant 0 : index
    %c0_32 = arith.constant 0 : index
    %32 = vector.load %arg2[%c6, %c0_31, %c0_32] : memref<16x4x4xf32, #tpu.memory_space<vmem>>, vector<1x4x4xf32>
    %33 = vector.shape_cast %32 : vector<1x4x4xf32> to vector<4x4xf32>
    %34 = vector.shape_cast %31 : vector<4x4xf32> to vector<1x4x4xf32>
    tpu.vector_store %arg2[%c6, %c0_31, %c0_32], %34 {strides = array<i32>} : memref<16x4x4xf32, #tpu.memory_space<vmem>>, vector<1x4x4xf32>,
    %c0_33 = arith.constant 0 : index
    %c4_34 = arith.constant 4 : index
    %c12_35 = arith.constant 12 : index
    %35 = vector.load %arg1[%c0_33, %c4_34, %c12_35] : memref<1x16x16xf32, #tpu.memory_space<vmem>>, vector<1x4x4xf32>
    %36 = vector.shape_cast %35 : vector<1x4x4xf32> to vector<4x4xf32>
    %c7 = arith.constant 7 : index
    %c0_36 = arith.constant 0 : index
    %c0_37 = arith.constant 0 : index
    %37 = vector.load %arg2[%c7, %c0_36, %c0_37] : memref<16x4x4xf32, #tpu.memory_space<vmem>>, vector<1x4x4xf32>
    %38 = vector.shape_cast %37 : vector<1x4x4xf32> to vector<4x4xf32>
    %39 = vector.shape_cast %36 : vector<4x4xf32> to vector<1x4x4xf32>
    tpu.vector_store %arg2[%c7, %c0_36, %c0_37], %39 {strides = array<i32>} : memref<16x4x4xf32, #tpu.memory_space<vmem>>, vector<1x4x4xf32>,
    %c0_38 = arith.constant 0 : index
    %c8_39 = arith.constant 8 : index
    %c0_40 = arith.constant 0 : index
    %40 = vector.load %arg1[%c0_38, %c8_39, %c0_40] : memref<1x16x16xf32, #tpu.memory_space<vmem>>, vector<1x4x4xf32>
    %41 = vector.shape_cast %40 : vector<1x4x4xf32> to vector<4x4xf32>
    %c8_41 = arith.constant 8 : index
    %c0_42 = arith.constant 0 : index
    %c0_43 = arith.constant 0 : index
    %42 = vector.load %arg2[%c8_41, %c0_42, %c0_43] : memref<16x4x4xf32, #tpu.memory_space<vmem>>, vector<1x4x4xf32>
    %43 = vector.shape_cast %42 : vector<1x4x4xf32> to vector<4x4xf32>
    %44 = vector.shape_cast %41 : vector<4x4xf32> to vector<1x4x4xf32>
    tpu.vector_store %arg2[%c8_41, %c0_42, %c0_43], %44 {strides = array<i32>} : memref<16x4x4xf32, #tpu.memory_space<vmem>>, vector<1x4x4xf32>,
    %c0_44 = arith.constant 0 : index
    %c8_45 = arith.constant 8 : index
    %c4_46 = arith.constant 4 : index
    %45 = vector.load %arg1[%c0_44, %c8_45, %c4_46] : memref<1x16x16xf32, #tpu.memory_space<vmem>>, vector<1x4x4xf32>
    %46 = vector.shape_cast %45 : vector<1x4x4xf32> to vector<4x4xf32>
    %c9 = arith.constant 9 : index
    %c0_47 = arith.constant 0 : index
    %c0_48 = arith.constant 0 : index
    %47 = vector.load %arg2[%c9, %c0_47, %c0_48] : memref<16x4x4xf32, #tpu.memory_space<vmem>>, vector<1x4x4xf32>
    %48 = vector.shape_cast %47 : vector<1x4x4xf32> to vector<4x4xf32>
    %49 = vector.shape_cast %46 : vector<4x4xf32> to vector<1x4x4xf32>
    tpu.vector_store %arg2[%c9, %c0_47, %c0_48], %49 {strides = array<i32>} : memref<16x4x4xf32, #tpu.memory_space<vmem>>, vector<1x4x4xf32>,
    %c0_49 = arith.constant 0 : index
    %c8_50 = arith.constant 8 : index
    %c8_51 = arith.constant 8 : index
    %50 = vector.load %arg1[%c0_49, %c8_50, %c8_51] : memref<1x16x16xf32, #tpu.memory_space<vmem>>, vector<1x4x4xf32>
    %51 = vector.shape_cast %50 : vector<1x4x4xf32> to vector<4x4xf32>
    %c10 = arith.constant 10 : index
    %c0_52 = arith.constant 0 : index
    %c0_53 = arith.constant 0 : index
    %52 = vector.load %arg2[%c10, %c0_52, %c0_53] : memref<16x4x4xf32, #tpu.memory_space<vmem>>, vector<1x4x4xf32>
    %53 = vector.shape_cast %52 : vector<1x4x4xf32> to vector<4x4xf32>
    %54 = vector.shape_cast %51 : vector<4x4xf32> to vector<1x4x4xf32>
    tpu.vector_store %arg2[%c10, %c0_52, %c0_53], %54 {strides = array<i32>} : memref<16x4x4xf32, #tpu.memory_space<vmem>>, vector<1x4x4xf32>,
    %c0_54 = arith.constant 0 : index
    %c8_55 = arith.constant 8 : index
    %c12_56 = arith.constant 12 : index
    %55 = vector.load %arg1[%c0_54, %c8_55, %c12_56] : memref<1x16x16xf32, #tpu.memory_space<vmem>>, vector<1x4x4xf32>
    %56 = vector.shape_cast %55 : vector<1x4x4xf32> to vector<4x4xf32>
    %c11 = arith.constant 11 : index
    %c0_57 = arith.constant 0 : index
    %c0_58 = arith.constant 0 : index
    %57 = vector.load %arg2[%c11, %c0_57, %c0_58] : memref<16x4x4xf32, #tpu.memory_space<vmem>>, vector<1x4x4xf32>
    %58 = vector.shape_cast %57 : vector<1x4x4xf32> to vector<4x4xf32>
    %59 = vector.shape_cast %56 : vector<4x4xf32> to vector<1x4x4xf32>
    tpu.vector_store %arg2[%c11, %c0_57, %c0_58], %59 {strides = array<i32>} : memref<16x4x4xf32, #tpu.memory_space<vmem>>, vector<1x4x4xf32>,
    %c0_59 = arith.constant 0 : index
    %c12_60 = arith.constant 12 : index
    %c0_61 = arith.constant 0 : index
    %60 = vector.load %arg1[%c0_59, %c12_60, %c0_61] : memref<1x16x16xf32, #tpu.memory_space<vmem>>, vector<1x4x4xf32>
    %61 = vector.shape_cast %60 : vector<1x4x4xf32> to vector<4x4xf32>
    %c12_62 = arith.constant 12 : index
    %c0_63 = arith.constant 0 : index
    %c0_64 = arith.constant 0 : index
    %62 = vector.load %arg2[%c12_62, %c0_63, %c0_64] : memref<16x4x4xf32, #tpu.memory_space<vmem>>, vector<1x4x4xf32>
    %63 = vector.shape_cast %62 : vector<1x4x4xf32> to vector<4x4xf32>
    %64 = vector.shape_cast %61 : vector<4x4xf32> to vector<1x4x4xf32>
    tpu.vector_store %arg2[%c12_62, %c0_63, %c0_64], %64 {strides = array<i32>} : memref<16x4x4xf32, #tpu.memory_space<vmem>>, vector<1x4x4xf32>,
    %c0_65 = arith.constant 0 : index
    %c12_66 = arith.constant 12 : index
    %c4_67 = arith.constant 4 : index
    %65 = vector.load %arg1[%c0_65, %c12_66, %c4_67] : memref<1x16x16xf32, #tpu.memory_space<vmem>>, vector<1x4x4xf32>
    %66 = vector.shape_cast %65 : vector<1x4x4xf32> to vector<4x4xf32>
    %c13 = arith.constant 13 : index
    %c0_68 = arith.constant 0 : index
    %c0_69 = arith.constant 0 : index
    %67 = vector.load %arg2[%c13, %c0_68, %c0_69] : memref<16x4x4xf32, #tpu.memory_space<vmem>>, vector<1x4x4xf32>
    %68 = vector.shape_cast %67 : vector<1x4x4xf32> to vector<4x4xf32>
    %69 = vector.shape_cast %66 : vector<4x4xf32> to vector<1x4x4xf32>
    tpu.vector_store %arg2[%c13, %c0_68, %c0_69], %69 {strides = array<i32>} : memref<16x4x4xf32, #tpu.memory_space<vmem>>, vector<1x4x4xf32>,
    %c0_70 = arith.constant 0 : index
    %c12_71 = arith.constant 12 : index
    %c8_72 = arith.constant 8 : index
    %70 = vector.load %arg1[%c0_70, %c12_71, %c8_72] : memref<1x16x16xf32, #tpu.memory_space<vmem>>, vector<1x4x4xf32>
    %71 = vector.shape_cast %70 : vector<1x4x4xf32> to vector<4x4xf32>
    %c14 = arith.constant 14 : index
    %c0_73 = arith.constant 0 : index
    %c0_74 = arith.constant 0 : index
    %72 = vector.load %arg2[%c14, %c0_73, %c0_74] : memref<16x4x4xf32, #tpu.memory_space<vmem>>, vector<1x4x4xf32>
    %73 = vector.shape_cast %72 : vector<1x4x4xf32> to vector<4x4xf32>
    %74 = vector.shape_cast %71 : vector<4x4xf32> to vector<1x4x4xf32>
    tpu.vector_store %arg2[%c14, %c0_73, %c0_74], %74 {strides = array<i32>} : memref<16x4x4xf32, #tpu.memory_space<vmem>>, vector<1x4x4xf32>,
    %c0_75 = arith.constant 0 : index
    %c12_76 = arith.constant 12 : index
    %c12_77 = arith.constant 12 : index
    %75 = vector.load %arg1[%c0_75, %c12_76, %c12_77] : memref<1x16x16xf32, #tpu.memory_space<vmem>>, vector<1x4x4xf32>
    %76 = vector.shape_cast %75 : vector<1x4x4xf32> to vector<4x4xf32>
    %c15 = arith.constant 15 : index
    %c0_78 = arith.constant 0 : index
    %c0_79 = arith.constant 0 : index
    %77 = vector.load %arg2[%c15, %c0_78, %c0_79] : memref<16x4x4xf32, #tpu.memory_space<vmem>>, vector<1x4x4xf32>
    %78 = vector.shape_cast %77 : vector<1x4x4xf32> to vector<4x4xf32>
    %79 = vector.shape_cast %76 : vector<4x4xf32> to vector<1x4x4xf32>
    tpu.vector_store %arg2[%c15, %c0_78, %c0_79], %79 {strides = array<i32>} : memref<16x4x4xf32, #tpu.memory_space<vmem>>, vector<1x4x4xf32>,
    return
  }
  func.func @transform_0(%arg0: i32) -> (i32, i32, i32) {
    %c0_i32 = arith.constant 0 : i32
    %c0_i32_0 = arith.constant 0 : i32
    %c0_i32_1 = arith.constant 0 : i32
    return %arg0, %c0_i32, %c0_i32_0 : i32, i32, i32
  }
  func.func @transform_1(%arg0: i32) -> (i32, i32, i32) {
    %c0_i32 = arith.constant 0 : i32
    %c0_i32_0 = arith.constant 0 : i32
    %c0_i32_1 = arith.constant 0 : i32
    return %arg0, %c0_i32, %c0_i32_0 : i32, i32, i32
  }
}

</mosaic_0001>

<llo_original>
// kernel: tpu_custom_call.1
$region0: #{tpu_custom_call.1}
  #allocation0 [shape = 'u32[]', space=smem, size = 0x4, offset = 0x4, fixed_abs, tag = 'smem constant byte address 0x4 - core index']
  #allocation1 [shape = 'u32[144,128]{1,0:T(1,128)}', space=vmem, size = 0x12000, scoped, tag = 'internal scratch']
  %s0 = inlined_call_operand.hbm [shape: f32[2,16,16], index: 0, kind: input, shape index: {}]
  %s1 = inlined_call_operand.vmem [shape: f32[32,4,4], index: 1, kind: output, shape index: {}]
  %s2 = sld [smem:[#allocation0]]
  $region41: #{tpu_custom_call.1} parent=0
    _
  %s4 = ssub.s32 1, %s2
  %s5 = scalar_select 0, %s4, %s2
  $region1: #{tpu_custom_call.1} parent=0
    #allocation2 [shape = 'u8[16384]{0}', space=vmem, size = 0x4000, scoped, tag = 'input window, operand 0']
    #allocation3 [shape = 's32[2]{0}', space=sflag, size = 0x8, scoped, tag = 'scoped memory for tpu_custom_call.1']
    %6 = vsyncpa [#allocation3], 0
    %s7 = scalar_lea.sflag [#allocation3], 1
    %8 = vsyncpa %s7, 0
    loop: start=0, step=1, limit=4
    $region2: #{tpu_custom_call.1} parent=1 // loop_pre_header
      _
    $region3: #{tpu_custom_call.1} parent=1 // loop_header
      %s10 = sphi 0, %s14
      %p11 = scmp.ge.s32.totalorder %s10, 4
      %s20 = sphi 0, %s22
      %s23 = sphi 0, %s20
      %s24 = sphi 0, %s23
      %s40 = sphi 0, %s24
      %s46 = sphi 0, %s48
      %s49 = sphi 0, %s46
      %s50 = sphi 0, %s49
      %s66 = sphi 0, %s50
    $region4: #{tpu_custom_call.1} parent=1 // loop_header_branch
      %13 = sbr.rel (%p11) target = $region8
    $region5: #{tpu_custom_call.1} parent=1 // loop_body
      %s15 = ssub.s32 %s10, 1
      %s16 = ssub.s32 %s10, 2
      %s17 = sadd.s32 %s10, 1
      %s18 = ssub.s32 %s10, %s17
      %p19 = scmp.eq.s32.totalorder %s18, 0
      %s21 = sadd.s32 %s20, 1
      %s22 = scalar_select %p19, %s20, %s21
      %p25 = pneg %p19
      %p26 = scmp.eq.s32.totalorder %s10, 1
      %p27 = por %p25, %p26
      %p28 = scmp.ne.s32.totalorder %s20, %s23
      %p29 = scmp.eq.s32.totalorder %s10, 0
      %p30 = por %p28, %p29
      %p31 = scmp.ne.s32.totalorder %s20, %s23
      %p32 = scmp.eq.s32.totalorder %s15, 1
      %p33 = por %p31, %p32
      %p34 = scmp.ne.s32.totalorder %s23, %s24
      %p35 = scmp.eq.s32.totalorder %s15, 0
      %p36 = por %p34, %p35
      %p37 = scmp.ne.s32.totalorder %s23, %s24
      %p38 = scmp.eq.s32.totalorder %s16, 1
      %p39 = por %p37, %p38
      %p41 = scmp.ne.s32.totalorder %s24, %s40
      %p42 = scmp.eq.s32.totalorder %s16, 0
      %p43 = por %p41, %p42
      %s44 = ssub.s32 %s10, %s17
      %p45 = scmp.eq.s32.totalorder %s44, 0
      %s47 = sadd.s32 %s46, 1
      %s48 = scalar_select %p45, %s46, %s47
      %p51 = pneg %p45
      %p52 = scmp.eq.s32.totalorder %s10, 1
      %p53 = por %p51, %p52
      %p54 = scmp.ne.s32.totalorder %s46, %s49
      %p55 = scmp.eq.s32.totalorder %s10, 0
      %p56 = por %p54, %p55
      %p57 = scmp.ne.s32.totalorder %s46, %s49
      %p58 = scmp.eq.s32.totalorder %s15, 1
      %p59 = por %p57, %p58
      %p60 = scmp.ne.s32.totalorder %s49, %s50
      %p61 = scmp.eq.s32.totalorder %s15, 0
      %p62 = por %p60, %p61
      %p63 = scmp.ne.s32.totalorder %s49, %s50
      %p64 = scmp.eq.s32.totalorder %s16, 1
      %p65 = por %p63, %p64
      %p67 = scmp.ne.s32.totalorder %s50, %s66
      %p68 = scmp.eq.s32.totalorder %s16, 0
      %p69 = por %p67, %p68
      %p70 = scmp.le.s32.totalorder 1, %s10
      %p71 = scmp.lt.s32.totalorder %s10, 3
      %p72 = pnand %p70, %p71
      %p73 = pneg %p72
      // Predicated region
      $region9: #{tpu_custom_call.1} parent=5 // pred_check
        _
      $region10: #{tpu_custom_call.1} parent=5 // pred_check_branch
        %75 = sbr.rel (%p72) target = $region12
      $region11: #{tpu_custom_call.1} parent=5 // pred_region
        %s76 = ssub.s32 %s10, 1
      $region12: #{tpu_custom_call.1} parent=5 // pred_fallthru
        _
      %p77 = scmp.lt.s32.totalorder %s10, 2
      // Predicated region
      $region13: #{tpu_custom_call.1} parent=5 // pred_check
        %p78 = pneg %p77
      $region14: #{tpu_custom_call.1} parent=5 // pred_check_branch
        %80 = sbr.rel (%p78) target = $region16
      $region15: #{tpu_custom_call.1} parent=5 // pred_region
        // Predicated region
        $region17: #{tpu_custom_call.1} parent=15 // pred_check
          %p81 = pneg %p30
        $region18: #{tpu_custom_call.1} parent=15 // pred_check_branch
          %83 = sbr.rel (%p81) target = $region20
        $region19: #{tpu_custom_call.1} parent=15 // pred_region
          %s84 = sand.u32 %s20, 1
          %s85 = scalar_lea.sflag [#allocation3], %s84
          %s86 = sand.u32 %s20, 1
          %s87 = smul.addr %s86, 16
          %s88 = scalar_lea.vmem [#allocation2], %s87
          %s90 = ssub.s32 256, 256
          %91 = vsyncadd %s85, %s90
          %s92 = smul.addr %s10, 2
          %s93 = smul.addr %s92, 128
          %s94 = scalar_lea.hbm %s0, %s93
          %s95 = sshll.u32 %s88, 4
          %s96 = int_to_ptr.vmem [resolvable:$true] %s95
          %101 = dma.hbm_to_vmem [thread:$0]  %s94, 256, %s96, %s85, 128, 128, 8
        $region20: #{tpu_custom_call.1} parent=15 // pred_fallthru
          _
      $region16: #{tpu_custom_call.1} parent=5 // pred_fallthru
        _
      %p102 = scmp.le.s32.totalorder 1, %s10
      %p103 = scmp.lt.s32.totalorder %s10, 3
      %p104 = pnand %p102, %p103
      %p105 = pneg %p104
      // Predicated region
      $region21: #{tpu_custom_call.1} parent=5 // pred_check
        _
      $region22: #{tpu_custom_call.1} parent=5 // pred_check_branch
        %107 = sbr.rel (%p104) target = $region24
      $region23: #{tpu_custom_call.1} parent=5 // pred_region
        %s108 = ssub.s32 %s10, 1
        %s109 = sand.u32 %s23, 1
        %s110 = scalar_lea.sflag [#allocation3], %s109
        %s111 = sand.u32 %s23, 1
        %s112 = smul.addr %s111, 16
        %s113 = scalar_lea.vmem [#allocation2], %s112
        // Predicated region
        $region25: #{tpu_custom_call.1} parent=23 // pred_check
          %p114 = pneg %p36
        $region26: #{tpu_custom_call.1} parent=23 // pred_check_branch
          %116 = sbr.rel (%p114) target = $region28
        $region27: #{tpu_custom_call.1} parent=23 // pred_region
          %117 = dma.done %s110, 256
        $region28: #{tpu_custom_call.1} parent=23 // pred_fallthru
          _
        %s118 = sand.u32 %s23, 1
        %s119 = scalar_lea.sflag [#allocation3], %s118
        %s120 = sand.u32 %s23, 1
        %s121 = smul.addr %s120, 16
        %s122 = scalar_lea.vmem [#allocation2], %s121
        %p123 = pneg %p36
        %p124 = pneg %p33
        %p125 = pneg %p62
        %p126 = pneg %p59
        %s127 = smul.u32 16, %s15
        %p128 = scmp.lt.s32.totalorder %s127, 31
        %s129 = scalar_select %p128, %s127, 31
        %s130 = smul.addr %s129, 4
        %s131 = scalar_lea.vmem %s1, %s130
        %s132 = smul.u32 16, %s15
        %p133 = scmp.lt.s32.totalorder %s132, 31
        %s134 = scalar_select %p133, %s132, 31
        %s135 = smul.addr %s134, 4
        %s136 = scalar_lea.vmem %s1, %s135
        %s137 = smul.u32 16, %s15
        %v138 = vld [vmem:[%s113] sm:$0xf]
        %vm139 = vcmask 27648
        %140 = vst.msk [vmem:[%s136] sm:$0xf] %vm139, %v138
        %v141 = vld [vmem:[%s113] sm:$0xf]
        %143 = vrot.lane.b32.xlu0 %v141, 124
        %v144 = vpop.permute.xlu0 %143
        %s146 = scalar_lea.vmem %s136, 4
        %147 = vst.msk [vmem:[%s146] sm:$0xf] %vm139, %v144
        %v148 = vld [vmem:[%s113] sm:$0xf]
        %150 = vrot.lane.b32.xlu0 %v148, 120
        %v151 = vpop.permute.xlu0 %150
        %s153 = scalar_lea.vmem %s136, 8
        %154 = vst.msk [vmem:[%s153] sm:$0xf] %vm139, %v151
        %v155 = vld [vmem:[%s113] sm:$0xf]
        %157 = vrot.lane.b32.xlu0 %v155, 116
        %v158 = vpop.permute.xlu0 %157
        %s160 = scalar_lea.vmem %s136, 12
        %161 = vst.msk [vmem:[%s160] sm:$0xf] %vm139, %v158
        %v162 = vld [vmem:[%s113 + $0x4] sm:$0xf]
        %s163 = scalar_lea.vmem %s136, 16
        %164 = vst.msk [vmem:[%s163] sm:$0xf] %vm139, %v162
        %v165 = vld [vmem:[%s113 + $0x4] sm:$0xf]
        %167 = vrot.lane.b32.xlu0 %v165, 124
        %v168 = vpop.permute.xlu0 %167
        %s170 = scalar_lea.vmem %s136, 20
        %171 = vst.msk [vmem:[%s170] sm:$0xf] %vm139, %v168
        %v172 = vld [vmem:[%s113 + $0x4] sm:$0xf]
        %174 = vrot.lane.b32.xlu0 %v172, 120
        %v175 = vpop.permute.xlu0 %174
        %s177 = scalar_lea.vmem %s136, 24
        %178 = vst.msk [vmem:[%s177] sm:$0xf] %vm139, %v175
        %v179 = vld [vmem:[%s113 + $0x4] sm:$0xf]
        %181 = vrot.lane.b32.xlu0 %v179, 116
        %v182 = vpop.permute.xlu0 %181
        %s184 = scalar_lea.vmem %s136, 28
        %185 = vst.msk [vmem:[%s184] sm:$0xf] %vm139, %v182
        %v186 = vld [vmem:[%s113 + $0x8] sm:$0xf]
        %s187 = scalar_lea.vmem %s136, 32
        %188 = vst.msk [vmem:[%s187] sm:$0xf] %vm139, %v186
        %v189 = vld [vmem:[%s113 + $0x8] sm:$0xf]
        %191 = vrot.lane.b32.xlu0 %v189, 124
        %v192 = vpop.permute.xlu0 %191
        %s194 = scalar_lea.vmem %s136, 36
        %195 = vst.msk [vmem:[%s194] sm:$0xf] %vm139, %v192
        %v196 = vld [vmem:[%s113 + $0x8] sm:$0xf]
        %198 = vrot.lane.b32.xlu0 %v196, 120
        %v199 = vpop.permute.xlu0 %198
        %s201 = scalar_lea.vmem %s136, 40
        %202 = vst.msk [vmem:[%s201] sm:$0xf] %vm139, %v199
        %v203 = vld [vmem:[%s113 + $0x8] sm:$0xf]
        %205 = vrot.lane.b32.xlu0 %v203, 116
        %v206 = vpop.permute.xlu0 %205
        %s208 = scalar_lea.vmem %s136, 44
        %209 = vst.msk [vmem:[%s208] sm:$0xf] %vm139, %v206
        %v210 = vld [vmem:[%s113 + $0xc] sm:$0xf]
        %s211 = scalar_lea.vmem %s136, 48
        %212 = vst.msk [vmem:[%s211] sm:$0xf] %vm139, %v210
        %v213 = vld [vmem:[%s113 + $0xc] sm:$0xf]
        %215 = vrot.lane.b32.xlu0 %v213, 124
        %v216 = vpop.permute.xlu0 %215
        %s218 = scalar_lea.vmem %s136, 52
        %219 = vst.msk [vmem:[%s218] sm:$0xf] %vm139, %v216
        %v220 = vld [vmem:[%s113 + $0xc] sm:$0xf]
        %222 = vrot.lane.b32.xlu0 %v220, 120
        %v223 = vpop.permute.xlu0 %222
        %s225 = scalar_lea.vmem %s136, 56
        %226 = vst.msk [vmem:[%s225] sm:$0xf] %vm139, %v223
        %v227 = vld [vmem:[%s113 + $0xc] sm:$0xf]
        %229 = vrot.lane.b32.xlu0 %v227, 116
        %v230 = vpop.permute.xlu0 %229
        %s232 = scalar_lea.vmem %s136, 60
        %233 = vst.msk [vmem:[%s232] sm:$0xf] %vm139, %v230
        %s234 = smul.u32 16, %s15
        %p235 = scmp.lt.s32.totalorder %s234, 31
        %s236 = scalar_select %p235, %s234, 31
        %s237 = smul.addr %s236, 4
        %s238 = scalar_lea.vmem %s1, %s237
        // Predicated region
        $region29: #{tpu_custom_call.1} parent=23 // pred_check
          %p239 = pneg %p59
        $region30: #{tpu_custom_call.1} parent=23 // pred_check_branch
          %241 = sbr.rel (%p239) target = $region32
        $region31: #{tpu_custom_call.1} parent=23 // pred_region
          %s242 = smul.u32 16, %s15
        $region32: #{tpu_custom_call.1} parent=23 // pred_fallthru
          _
      $region24: #{tpu_custom_call.1} parent=5 // pred_fallthru
        _
      %p243 = scmp.le.s32.totalorder 2, %s10
      // Predicated region
      $region33: #{tpu_custom_call.1} parent=5 // pred_check
        %p244 = pneg %p243
      $region34: #{tpu_custom_call.1} parent=5 // pred_check_branch
        %246 = sbr.rel (%p244) target = $region36
      $region35: #{tpu_custom_call.1} parent=5 // pred_region
        %s247 = ssub.s32 %s10, 2
        // Predicated region
        $region37: #{tpu_custom_call.1} parent=35 // pred_check
          %p248 = pneg %p65
        $region38: #{tpu_custom_call.1} parent=35 // pred_check_branch
          %250 = sbr.rel (%p248) target = $region40
        $region39: #{tpu_custom_call.1} parent=35 // pred_region
          %s251 = smul.u32 16, %s16
          %p252 = scmp.lt.s32.totalorder %s251, 31
          %s253 = scalar_select %p252, %s251, 31
          %s254 = smul.addr %s253, 4
          %s255 = scalar_lea.vmem %s1, %s254
        $region40: #{tpu_custom_call.1} parent=35 // pred_fallthru
          _
      $region36: #{tpu_custom_call.1} parent=5 // pred_fallthru
        _
    $region6: #{tpu_custom_call.1} parent=1 // loop_footer
      %s14 = sadd.s32 1, %s10
    $region7: #{tpu_custom_call.1} parent=1 // loop_footer_branch
      %9 = sbr.rel target = $region3
    $region8: #{tpu_custom_call.1} parent=1 // loop_exit
      _
    %256 = vsyncpa [#allocation3], 1
    %s257 = scalar_lea.sflag [#allocation3], 1
    %258 = vsyncpa %s257, 1

</llo_original>
